<compile_context>
chip_gen: v7x
topology: tpu7x:2x2x1
jax: 0.10.0
libtpu: 0.0.40
codegen_flags: <defaults>
</compile_context>

<pallas_src>
import jax
import jax.numpy as jnp
from jax.experimental import pallas as pl
from jax.experimental.pallas import tpu as pltpu

LANE = 128  # batch tile is a multiple of the 128-lane vreg width


def _round_up(a, m):
    return ((a + m - 1) // m) * m


def mlp_kernel(xT_ref, w1_ref, b1_ref, w2_ref, b2_ref, w3_ref, b3_ref, o_ref):
    # One batch tile per grid step; weights/biases are VMEM-resident across steps.
    xT = xT_ref[...]                                                # (in_p, tb) bf16

    # fc1 + ReLU: (h1_p, in_p) @ (in_p, tb) -> (h1_p, tb), f32 accumulation
    h1 = jnp.dot(w1_ref[...], xT, preferred_element_type=jnp.float32) + b1_ref[...]
    h1 = jnp.maximum(h1, 0.0)                                       # ReLU (VPU, f32)

    # fc2 + ReLU
    h2 = jnp.dot(w2_ref[...], h1.astype(jnp.bfloat16),
                 preferred_element_type=jnp.float32) + b2_ref[...]
    h2 = jnp.maximum(h2, 0.0)

    # fc3 (output features padded to 8 sublanes; only row 0 is real)
    z = jnp.dot(w3_ref[...], h2.astype(jnp.bfloat16),
                preferred_element_type=jnp.float32) + b3_ref[...]   # (h3_p, tb)
    zc = z[0:1, :]                                                  # (1, tb) real row

    # exact sigmoid in f32; lane-dense (1, tb) store of real data only
    o_ref[...] = 1.0 / (1.0 + jnp.exp(-zc))


def simple_nn_forward(x, params, *, block_batch=2048):
    """x: (batch, input_size) f32; params: (in,out) weights / (1,out) biases."""
    w1, b1, w2, b2, w3, b3 = params
    batch, in_features = x.shape
    assert w3.shape[1] == 1, "kernel epilogue assumes a scalar output head"

    in_p = _round_up(in_features, 8)
    h1_p = _round_up(w1.shape[1], 16)   # 16 -> 16
    h2_p = _round_up(w2.shape[1], 16)   # 8  -> 16 (bf16 sublane tile for layer-3 K)
    h3_p = _round_up(w3.shape[1], 8)    # 1  -> 8  (row 0 is the real output)

    # Transposed, zero-padded weights (out_pad, in_pad) in bf16; biases (out_pad, 1) f32.
    def prep_w(w, out_p, in_pp):
        wt = w.T  # (out, in)
        wt = jnp.pad(wt, ((0, out_p - wt.shape[0]), (0, in_pp - wt.shape[1])))
        return wt.astype(jnp.bfloat16)

    def prep_b(b, out_p):
        bt = b.reshape(-1, 1)  # (out, 1)
        return jnp.pad(bt, ((0, out_p - bt.shape[0]), (0, 0))).astype(jnp.float32)

    w1t, b1t = prep_w(w1, h1_p, in_p), prep_b(b1, h1_p)
    w2t, b2t = prep_w(w2, h2_p, h1_p), prep_b(b2, h2_p)
    w3t, b3t = prep_w(w3, h3_p, h2_p), prep_b(b3, h3_p)

    # Batch tile: multiple of 128 lanes, capped at block_batch; for large
    # batches cap tb so the grid has >= 2 steps (v7x has 2 TensorCores and the
    # "parallel" axis only helps if both get work).
    block_batch = max(LANE, (block_batch // LANE) * LANE)
    b_lanes = _round_up(batch, LANE)
    tb = min(block_batch, b_lanes)
    if b_lanes >= 2 * LANE and b_lanes < 2 * tb:
        tb = _round_up((b_lanes + 1) // 2, LANE)
    padded_batch = _round_up(batch, tb)
    num_tiles = padded_batch // tb

    # Transpose + pad + bf16-cast x once in the wrapper: batch on the lane axis.
    xT = jnp.pad(x, ((0, padded_batch - batch), (0, in_p - in_features)))
    xT = xT.T.astype(jnp.bfloat16)                       # (in_p, padded_batch)

    const = lambda i: (0, 0)  # weights/biases: same block every step (VMEM-resident)

    out_row = pl.pallas_call(
        mlp_kernel,
        out_shape=jax.ShapeDtypeStruct((1, padded_batch), jnp.float32),
        grid=(num_tiles,),
        in_specs=[
            pl.BlockSpec((in_p, tb), lambda i: (0, i)),   # x^T tile streams through VMEM
            pl.BlockSpec((h1_p, in_p), const),            # w1^T
            pl.BlockSpec((h1_p, 1), const),               # b1
            pl.BlockSpec((h2_p, h1_p), const),            # w2^T
            pl.BlockSpec((h2_p, 1), const),               # b2
            pl.BlockSpec((h3_p, h2_p), const),            # w3^T
            pl.BlockSpec((h3_p, 1), const),               # b3
        ],
        out_specs=pl.BlockSpec((1, tb), lambda i: (0, i)),  # lane-dense real-data store
        compiler_params=pltpu.CompilerParams(
            dimension_semantics=("parallel",),   # shard batch tiles across TCs (v7x)
            vmem_limit_bytes=32 * 1024 * 1024,   # v7x-safe, lifts v5e's 16 MiB default
        ),
    )(xT, w1t, b1t, w2t, b2t, w3t, b3t)

    # Drop batch padding; return (batch, 1) like the module.
    return out_row[0, :batch].reshape(batch, 1)


def init_params(key, input_size):
    # Mimics nn.Linear's U(-1/sqrt(fan_in), +1/sqrt(fan_in)); weights stored (in, out).
    def linear(key, fan_in, fan_out):
        kw, kb = jax.random.split(key)
        bound = 1.0 / jnp.sqrt(float(fan_in))
        w = jax.random.uniform(kw, (fan_in, fan_out), jnp.float32, -bound, bound)
        b = jax.random.uniform(kb, (1, fan_out), jnp.float32, -bound, bound)
        return w, b

    k1, k2, k3 = jax.random.split(key, 3)
    w1, b1 = linear(k1, input_size, 16)
    w2, b2 = linear(k2, 16, 8)
    w3, b3 = linear(k3, 8, 1)
    return w1, b1, w2, b2, w3, b3


if __name__ == "__main__":
    key = jax.random.PRNGKey(0)
    kx, kp = jax.random.split(key)

    # TODO(synk): StandardScaler preprocessing happens outside the module's
    # forward; inputs here stand in for already-standardized (unit-normal) features.
    batch, input_size = 8, 32
    x = jax.random.normal(kx, (batch, input_size), jnp.float32)
    params = init_params(kp, input_size)

    out = simple_nn_forward(x, params)
    jax.block_until_ready(out)

    # f32 reference of the module (exact sigmoid). The kernel feeds the MXU
    # bf16 inputs with f32 accumulation -> allow a few-1e-3 absolute slack.
    w1, b1, w2, b2, w3, b3 = params
    h1 = jnp.maximum(x @ w1 + b1, 0.0)
    h2 = jnp.maximum(h1 @ w2 + b2, 0.0)
    ref = jax.nn.sigmoid(h2 @ w3 + b3)
    assert out.shape == (batch, 1)
    assert jnp.allclose(out, ref, atol=5e-3), "mismatch vs reference"

    print("KERNEL_OK")
</pallas_src>

<mosaic_0001>
module attributes {stable_mosaic.version = 11 : i64} {
  func.func @mlp_kernel(%arg0: i32, %arg1: memref<32x128xbf16, #tpu.memory_space<vmem>>, %arg2: memref<16x32xbf16, #tpu.memory_space<vmem>>, %arg3: memref<16x1xf32, #tpu.memory_space<vmem>>, %arg4: memref<16x16xbf16, #tpu.memory_space<vmem>>, %arg5: memref<16x1xf32, #tpu.memory_space<vmem>>, %arg6: memref<8x16xbf16, #tpu.memory_space<vmem>>, %arg7: memref<8x1xf32, #tpu.memory_space<vmem>>, %arg8: memref<1x128xf32, #tpu.memory_space<vmem>>) attributes {dimension_semantics = [#tpu.dimension_semantics<parallel>], iteration_bounds = array<i64: 1>, scalar_prefetch = 0 : i64, scratch_operands = 0 : i64, tpu.core_type = #tpu.core_type<tc>, window_params = [{transform_indices = @transform_0, window_bounds = array<i64: 32, 128>}, {pipeline_mode = #tpu.pipeline_mode<synchronous>, transform_indices = @transform_1, window_bounds = array<i64: 16, 32>}, {pipeline_mode = #tpu.pipeline_mode<synchronous>, transform_indices = @transform_2, window_bounds = array<i64: 16, 1>}, {pipeline_mode = #tpu.pipeline_mode<synchronous>, transform_indices = @transform_3, window_bounds = array<i64: 16, 16>}, {pipeline_mode = #tpu.pipeline_mode<synchronous>, transform_indices = @transform_4, window_bounds = array<i64: 16, 1>}, {pipeline_mode = #tpu.pipeline_mode<synchronous>, transform_indices = @transform_5, window_bounds = array<i64: 8, 16>}, {pipeline_mode = #tpu.pipeline_mode<synchronous>, transform_indices = @transform_6, window_bounds = array<i64: 8, 1>}, {transform_indices = @transform_7, window_bounds = array<i64: 1, 128>}]} {
    %c0 = arith.constant 0 : index
    %c0_0 = arith.constant 0 : index
    %0 = vector.load %arg1[%c0, %c0_0] : memref<32x128xbf16, #tpu.memory_space<vmem>>, vector<32x128xbf16>
    %c0_1 = arith.constant 0 : index
    %c0_2 = arith.constant 0 : index
    %1 = vector.load %arg2[%c0_1, %c0_2] : memref<16x32xbf16, #tpu.memory_space<vmem>>, vector<16x32xbf16>
    %cst = arith.constant dense<0.000000e+00> : vector<16x128xf32>
    %2 = tpu.matmul %1, %0, %cst {dimension_numbers = #tpu.dot_dimension_numbers<[1], [0], [0], [1], [0, 0, 1, 1], [], []>} : vector<16x32xbf16>, vector<32x128xbf16>, vector<16x128xf32> -> vector<16x128xf32>
    %c0_3 = arith.constant 0 : index
    %c0_4 = arith.constant 0 : index
    %3 = vector.load %arg3[%c0_3, %c0_4] : memref<16x1xf32, #tpu.memory_space<vmem>>, vector<16x1xf32>
    %4 = vector.broadcast %3 : vector<16x1xf32> to vector<16x128xf32>
    %5 = arith.addf %2, %4 : vector<16x128xf32>
    %cst_5 = arith.constant 0.000000e+00 : f32
    %6 = vector.broadcast %cst_5 : f32 to vector<16x128xf32>
    %7 = arith.maximumf %5, %6 : vector<16x128xf32>
    %c0_6 = arith.constant 0 : index
    %c0_7 = arith.constant 0 : index
    %8 = vector.load %arg4[%c0_6, %c0_7] : memref<16x16xbf16, #tpu.memory_space<vmem>>, vector<16x16xbf16>
    %9 = arith.truncf %7 : vector<16x128xf32> to vector<16x128xbf16>
    %cst_8 = arith.constant dense<0.000000e+00> : vector<16x128xf32>
    %10 = tpu.matmul %8, %9, %cst_8 {dimension_numbers = #tpu.dot_dimension_numbers<[1], [0], [0], [1], [0, 0, 1, 1], [], []>} : vector<16x16xbf16>, vector<16x128xbf16>, vector<16x128xf32> -> vector<16x128xf32>
    %c0_9 = arith.constant 0 : index
    %c0_10 = arith.constant 0 : index
    %11 = vector.load %arg5[%c0_9, %c0_10] : memref<16x1xf32, #tpu.memory_space<vmem>>, vector<16x1xf32>
    %12 = vector.broadcast %11 : vector<16x1xf32> to vector<16x128xf32>
    %13 = arith.addf %10, %12 : vector<16x128xf32>
    %cst_11 = arith.constant 0.000000e+00 : f32
    %14 = vector.broadcast %cst_11 : f32 to vector<16x128xf32>
    %15 = arith.maximumf %13, %14 : vector<16x128xf32>
    %c0_12 = arith.constant 0 : index
    %c0_13 = arith.constant 0 : index
    %16 = vector.load %arg6[%c0_12, %c0_13] : memref<8x16xbf16, #tpu.memory_space<vmem>>, vector<8x16xbf16>
    %17 = arith.truncf %15 : vector<16x128xf32> to vector<16x128xbf16>
    %cst_14 = arith.constant dense<0.000000e+00> : vector<8x128xf32>
    %18 = tpu.matmul %16, %17, %cst_14 {dimension_numbers = #tpu.dot_dimension_numbers<[1], [0], [0], [1], [0, 0, 1, 1], [], []>} : vector<8x16xbf16>, vector<16x128xbf16>, vector<8x128xf32> -> vector<8x128xf32>
    %c0_15 = arith.constant 0 : index
    %c0_16 = arith.constant 0 : index
    %19 = vector.load %arg7[%c0_15, %c0_16] : memref<8x1xf32, #tpu.memory_space<vmem>>, vector<8x1xf32>
    %20 = vector.broadcast %19 : vector<8x1xf32> to vector<8x128xf32>
    %21 = arith.addf %18, %20 : vector<8x128xf32>
    %22 = vector.extract_strided_slice %21 {offsets = [0, 0], sizes = [1, 128], strides = [1, 1]} : vector<8x128xf32> to vector<1x128xf32>
    %cst_17 = arith.constant 0.000000e+00 : f32
    %23 = vector.broadcast %cst_17 : f32 to vector<1x128xf32>
    %24 = arith.subf %23, %22 : vector<1x128xf32>
    %25 = math.exp %24 : vector<1x128xf32>
    %cst_18 = arith.constant 1.000000e+00 : f32
    %26 = vector.broadcast %cst_18 : f32 to vector<1x128xf32>
    %27 = arith.addf %26, %25 : vector<1x128xf32>
    %cst_19 = arith.constant 1.000000e+00 : f32
    %28 = vector.broadcast %cst_19 : f32 to vector<1x128xf32>
    %29 = arith.divf %28, %27 : vector<1x128xf32>
    %c0_20 = arith.constant 0 : index
    %c0_21 = arith.constant 0 : index
    %30 = vector.load %arg8[%c0_20, %c0_21] : memref<1x128xf32, #tpu.memory_space<vmem>>, vector<1x128xf32>
    tpu.vector_store %arg8[%c0_20, %c0_21], %29 {strides = array<i32>} : memref<1x128xf32, #tpu.memory_space<vmem>>, vector<1x128xf32>,
    return
  }
  func.func @transform_0(%arg0: i32) -> (i32, i32) {
    %c0_i32 = arith.constant 0 : i32
    %c0_i32_0 = arith.constant 0 : i32
    return %c0_i32, %arg0 : i32, i32
  }
  func.func @transform_1(%arg0: i32) -> (i32, i32) {
    %c0_i32 = arith.constant 0 : i32
    %c0_i32_0 = arith.constant 0 : i32
    %c0_i32_1 = arith.constant 0 : i32
    return %c0_i32, %c0_i32_0 : i32, i32
  }
  func.func @transform_2(%arg0: i32) -> (i32, i32) {
    %c0_i32 = arith.constant 0 : i32
    %c0_i32_0 = arith.constant 0 : i32
    %c0_i32_1 = arith.constant 0 : i32
    return %c0_i32, %c0_i32_0 : i32, i32
  }
  func.func @transform_3(%arg0: i32) -> (i32, i32) {
    %c0_i32 = arith.constant 0 : i32
    %c0_i32_0 = arith.constant 0 : i32
    %c0_i32_1 = arith.constant 0 : i32
    return %c0_i32, %c0_i32_0 : i32, i32
  }
  func.func @transform_4(%arg0: i32) -> (i32, i32) {
    %c0_i32 = arith.constant 0 : i32
    %c0_i32_0 = arith.constant 0 : i32
    %c0_i32_1 = arith.constant 0 : i32
    return %c0_i32, %c0_i32_0 : i32, i32
  }
  func.func @transform_5(%arg0: i32) -> (i32, i32) {
    %c0_i32 = arith.constant 0 : i32
    %c0_i32_0 = arith.constant 0 : i32
    %c0_i32_1 = arith.constant 0 : i32
    return %c0_i32, %c0_i32_0 : i32, i32
  }
  func.func @transform_6(%arg0: i32) -> (i32, i32) {
    %c0_i32 = arith.constant 0 : i32
    %c0_i32_0 = arith.constant 0 : i32
    %c0_i32_1 = arith.constant 0 : i32
    return %c0_i32, %c0_i32_0 : i32, i32
  }
  func.func @transform_7(%arg0: i32) -> (i32, i32) {
    %c0_i32 = arith.constant 0 : i32
    %c0_i32_0 = arith.constant 0 : i32
    return %c0_i32, %arg0 : i32, i32
  }
}

</mosaic_0001>

<llo_original>
// kernel: tpu_custom_call.1
$region0: #{tpu_custom_call.1}
  #allocation0 [shape = 'u32[]', space=smem, size = 0x4, offset = 0x4, fixed_abs, tag = 'smem constant byte address 0x4 - core index']
  #allocation1 [shape = 'u32[144,128]{1,0:T(1,128)}', space=vmem, size = 0x12000, scoped, tag = 'internal scratch']
  %s0 = inlined_call_operand.vmem [shape: bf16[32,128], index: 0, kind: input, shape index: {}]
  %s1 = inlined_call_operand.vmem [shape: bf16[16,32], index: 1, kind: input, shape index: {}]
  %s2 = inlined_call_operand.vmem [shape: f32[16,1], index: 2, kind: input, shape index: {}]
  %s3 = inlined_call_operand.vmem [shape: bf16[16,16], index: 3, kind: input, shape index: {}]
  %s4 = inlined_call_operand.vmem [shape: f32[16,1], index: 4, kind: input, shape index: {}]
  %s5 = inlined_call_operand.vmem [shape: bf16[8,16], index: 5, kind: input, shape index: {}]
  %s6 = inlined_call_operand.vmem [shape: f32[8,1], index: 6, kind: input, shape index: {}]
  %s7 = inlined_call_operand.hbm [shape: f32[1,128], index: 7, kind: output, shape index: {}]
  %s8 = sld [smem:[#allocation0]]
  $region38: #{tpu_custom_call.1} parent=0
    _
  %s10 = ssub.s32 1, %s8
  %s11 = scalar_select 0, %s10, %s8
  $region1: #{tpu_custom_call.1} parent=0
    #allocation2 [shape = 'u8[512]{0}', space=vmem, size = 0x400, scoped, tag = 'output window, operand 0, single buffered']
    #allocation3 [shape = 's32[1]{0}', space=sflag, size = 0x4, scoped, tag = 'scoped memory for tpu_custom_call.1']
    %12 = vsyncpa [#allocation3], 0
    // Predicated region
    $region2: #{tpu_custom_call.1} parent=1 // pred_check
      _
    $region3: #{tpu_custom_call.1} parent=1 // pred_check_branch
      %14 = sbr.rel (0) target = $region5
    $region4: #{tpu_custom_call.1} parent=1 // pred_region
      _
    $region5: #{tpu_custom_call.1} parent=1 // pred_fallthru
      _
    // Predicated region
    $region6: #{tpu_custom_call.1} parent=1 // pred_check
      _
    $region7: #{tpu_custom_call.1} parent=1 // pred_check_branch
      %16 = sbr.rel (0) target = $region9
    $region8: #{tpu_custom_call.1} parent=1 // pred_region
      _
    $region9: #{tpu_custom_call.1} parent=1 // pred_fallthru
      _
    // Predicated region
    $region10: #{tpu_custom_call.1} parent=1 // pred_check
      _
    $region11: #{tpu_custom_call.1} parent=1 // pred_check_branch
      %18 = sbr.rel (0) target = $region13
    $region12: #{tpu_custom_call.1} parent=1 // pred_region
      _
    $region13: #{tpu_custom_call.1} parent=1 // pred_fallthru
      _
    // Predicated region
    $region14: #{tpu_custom_call.1} parent=1 // pred_check
      _
    $region15: #{tpu_custom_call.1} parent=1 // pred_check_branch
      %20 = sbr.rel (0) target = $region17
    $region16: #{tpu_custom_call.1} parent=1 // pred_region
      _
    $region17: #{tpu_custom_call.1} parent=1 // pred_fallthru
      _
    // Predicated region
    $region18: #{tpu_custom_call.1} parent=1 // pred_check
      _
    $region19: #{tpu_custom_call.1} parent=1 // pred_check_branch
      %22 = sbr.rel (0) target = $region21
    $region20: #{tpu_custom_call.1} parent=1 // pred_region
      _
    $region21: #{tpu_custom_call.1} parent=1 // pred_fallthru
      _
    // Predicated region
    $region22: #{tpu_custom_call.1} parent=1 // pred_check
      _
    $region23: #{tpu_custom_call.1} parent=1 // pred_check_branch
      %24 = sbr.rel (0) target = $region25
    $region24: #{tpu_custom_call.1} parent=1 // pred_region
      _
    $region25: #{tpu_custom_call.1} parent=1 // pred_fallthru
      _
    // Predicated region
    $region26: #{tpu_custom_call.1} parent=1 // pred_check
      _
    $region27: #{tpu_custom_call.1} parent=1 // pred_check_branch
      %26 = sbr.rel (0) target = $region29
    $region28: #{tpu_custom_call.1} parent=1 // pred_region
      _
    $region29: #{tpu_custom_call.1} parent=1 // pred_fallthru
      _
    %v28 = vld [vmem:[%s0] sm:$0xf]
    %v29 = vld [vmem:[%s0 + $0x4] sm:$0xf]
    %v30 = vld [vmem:[%s0 + $0x8] sm:$0xf]
    %v31 = vld [vmem:[%s0 + $0xc] sm:$0xf]
    %v32 = vld [vmem:[%s1] sm:$0xf]
    %v33 = vld [vmem:[%s1 + $0x4] sm:$0xf]
    %v34 = vld [vmem:[%s2] sm:$0xff]
    %v35 = vld [vmem:[%s2 + $0x8] sm:$0xff]
    %37 = vset.pattern.permute.xlu0 0
    %38 = vperm.xlu0 %37, %v34
    %v39 = vpop.permute.xlu0 %38
    %42 = vset.pattern.permute.xlu0 0
    %43 = vperm.xlu0 %42, %v35
    %v44 = vpop.permute.xlu0 %43
    %v48 = vunpack.c.l.b16 %v32
    %v49 = vunpack.c.l.b16 %v33
    %v50 = vpack.c.b16 %v49, %v48
    %v55 = vunpack.c.l.b16 %v28
    %v56 = vunpack.c.l.b16 %v29
    %v57 = vunpack.c.l.b16 %v30
    %v58 = vunpack.c.l.b16 %v31
    %v59 = vpack.c.b16 %v56, %v55
    %v60 = vpack.c.b16 %v58, %v57
    %vm63 = vcmask 261120
    %v65 = vsel %vm63, %v50, 0
    %67 = vmatprep.subr.bf16.mxu0 0
    %68 = vmatpush1.bf16.msra.mxu0 %v59
    %69 = vmatprep.subr.bf16.mxu0 0
    %70 = vmatpush1.bf16.msra.mxu0 %v60
    %71 = vmatprep.subr.bf16.mxu0 0
    %72 = vmatpush1.bf16.msra.mxu0 0
    %73 = vmatprep.subr.bf16.mxu0 0
    %74 = vmatpush1.bf16.msra.mxu0 0
    %75 = vmatprep.subr.bf16.mxu0 0
    %76 = vmatpush1.bf16.msra.mxu0 0
    %77 = vmatprep.subr.bf16.mxu0 0
    %78 = vmatpush1.bf16.msra.mxu0 0
    %79 = vmatprep.subr.bf16.mxu0 0
    %80 = vmatpush1.bf16.msra.mxu0 0
    %81 = vmatprep.subr.bf16.mxu0 0
    %82 = vmatpush1.bf16.msra.mxu0 0
    %83 = vmatprep.subr.bf16.mxu0 0
    %84 = vmatpush1.bf16.msra.mxu0 0
    %85 = vmatprep.subr.bf16.mxu0 0
    %86 = vmatpush1.bf16.msra.mxu0 0
    %87 = vmatprep.subr.bf16.mxu0 0
    %88 = vmatpush1.bf16.msra.mxu0 0
    %89 = vmatprep.subr.bf16.mxu0 0
    %90 = vmatpush1.bf16.msra.mxu0 0
    %91 = vmatprep.subr.bf16.mxu0 0
    %92 = vmatpush1.bf16.msra.mxu0 0
    %93 = vmatprep.subr.bf16.mxu0 0
    %94 = vmatpush1.bf16.msra.mxu0 0
    %95 = vmatprep.subr.bf16.mxu0 0
    %96 = vmatpush1.bf16.msra.mxu0 0
    %97 = vmatprep.subr.bf16.mxu0 0
    %98 = vmatpush1.bf16.msra.mxu0 0
    %99 = vmatprep.mubr.bf16.mxu0 0
    %100 = vmatmul.mubr.bf16.gmra.mrb[0].mxu0 %v65
    %v101 = vpop.f32.mrb[0].mxu0
    %v102 = vadd.f32 %v39, %v101
    %v103 = vpop.f32.mrb[0].mxu0
    %v104 = vpop.f32.mrb[0].mxu0
    %v105 = vadd.f32 %v44, %v104
    %v106 = vpop.f32.mrb[0].mxu0
    %107 = vdwg.mxu0
    %v108 = vmax.f32 %v102, 0.0
    %v109 = vmax.f32 %v105, 0.0
    %v110 = vld [vmem:[%s3] sm:$0xf]
    %v111 = vld [vmem:[%s3 + $0x4] sm:$0xf]
    %v112 = vpack.c.bf16 %v109, %v108
    %v113 = vld [vmem:[%s4] sm:$0xff]
    %v114 = vld [vmem:[%s4 + $0x8] sm:$0xff]
    %116 = vset.pattern.permute.xlu0 0
    %117 = vperm.xlu0 %116, %v113
    %v118 = vpop.permute.xlu0 %117
    %121 = vset.pattern.permute.xlu0 0
    %122 = vperm.xlu0 %121, %v114
    %v123 = vpop.permute.xlu0 %122
    %v127 = vunpack.c.l.b16 %v110
    %v128 = vunpack.c.l.b16 %v111
    %v129 = vpack.c.b16 %v128, %v127
    %vm130 = vcmask 130048
    %v132 = vsel %vm130, %v129, 0
    %134 = vmatprep.subr.bf16.mxu0 0
    %135 = vmatpush1.bf16.msra.mxu0 %v112
    %136 = vmatprep.subr.bf16.mxu0 0
    %137 = vmatpush1.bf16.msra.mxu0 0
    %138 = vmatprep.subr.bf16.mxu0 0
    %139 = vmatpush1.bf16.msra.mxu0 0
    %140 = vmatprep.subr.bf16.mxu0 0
    %141 = vmatpush1.bf16.msra.mxu0 0
    %142 = vmatprep.subr.bf16.mxu0 0
    %143 = vmatpush1.bf16.msra.mxu0 0
    %144 = vmatprep.subr.bf16.mxu0 0
    %145 = vmatpush1.bf16.msra.mxu0 0
    %146 = vmatprep.subr.bf16.mxu0 0
    %147 = vmatpush1.bf16.msra.mxu0 0
    %148 = vmatprep.subr.bf16.mxu0 0
    %149 = vmatpush1.bf16.msra.mxu0 0
    %150 = vmatprep.subr.bf16.mxu0 0
    %151 = vmatpush1.bf16.msra.mxu0 0
    %152 = vmatprep.subr.bf16.mxu0 0
    %153 = vmatpush1.bf16.msra.mxu0 0
    %154 = vmatprep.subr.bf16.mxu0 0
    %155 = vmatpush1.bf16.msra.mxu0 0
    %156 = vmatprep.subr.bf16.mxu0 0
    %157 = vmatpush1.bf16.msra.mxu0 0
    %158 = vmatprep.subr.bf16.mxu0 0
    %159 = vmatpush1.bf16.msra.mxu0 0
    %160 = vmatprep.subr.bf16.mxu0 0
    %161 = vmatpush1.bf16.msra.mxu0 0
    %162 = vmatprep.subr.bf16.mxu0 0
    %163 = vmatpush1.bf16.msra.mxu0 0
    %164 = vmatprep.subr.bf16.mxu0 0
    %165 = vmatpush1.bf16.msra.mxu0 0
    %166 = vmatprep.mubr.bf16.mxu0 0
    %167 = vmatmul.mubr.bf16.gmra.mrb[0].mxu0 %v132
    %v168 = vpop.f32.mrb[0].mxu0
    %v169 = vadd.f32 %v118, %v168
    %v170 = vpop.f32.mrb[0].mxu0
    %v171 = vpop.f32.mrb[0].mxu0
    %v172 = vadd.f32 %v123, %v171
    %v173 = vpop.f32.mrb[0].mxu0
    %174 = vdwg.mxu0
    %v175 = vmax.f32 %v169, 0.0
    %v176 = vmax.f32 %v172, 0.0
    %v177 = vld [vmem:[%s5] sm:$0xf]
    %v178 = vpack.c.bf16 %v176, %v175
    %v179 = vld [vmem:[%s6] sm:$0xff]
    %181 = vset.pattern.permute.xlu0 0
    %182 = vperm.xlu0 %181, %v179
    %v183 = vpop.permute.xlu0 %182
    %v186 = vsel %vm130, %v177, 0
    %188 = vmatprep.subr.bf16.mxu0 0
    %189 = vmatpush1.bf16.msra.mxu0 %v178
    %190 = vmatprep.subr.bf16.mxu0 0
    %191 = vmatpush1.bf16.msra.mxu0 0
    %192 = vmatprep.subr.bf16.mxu0 0
    %193 = vmatpush1.bf16.msra.mxu0 0
    %194 = vmatprep.subr.bf16.mxu0 0
    %195 = vmatpush1.bf16.msra.mxu0 0
    %196 = vmatprep.subr.bf16.mxu0 0
    %197 = vmatpush1.bf16.msra.mxu0 0
    %198 = vmatprep.subr.bf16.mxu0 0
    %199 = vmatpush1.bf16.msra.mxu0 0
    %200 = vmatprep.subr.bf16.mxu0 0
    %201 = vmatpush1.bf16.msra.mxu0 0
    %202 = vmatprep.subr.bf16.mxu0 0
    %203 = vmatpush1.bf16.msra.mxu0 0
    %204 = vmatprep.subr.bf16.mxu0 0
    %205 = vmatpush1.bf16.msra.mxu0 0
    %206 = vmatprep.subr.bf16.mxu0 0
    %207 = vmatpush1.bf16.msra.mxu0 0
    %208 = vmatprep.subr.bf16.mxu0 0
    %209 = vmatpush1.bf16.msra.mxu0 0
    %210 = vmatprep.subr.bf16.mxu0 0
    %211 = vmatpush1.bf16.msra.mxu0 0
    %212 = vmatprep.subr.bf16.mxu0 0
    %213 = vmatpush1.bf16.msra.mxu0 0
    %214 = vmatprep.subr.bf16.mxu0 0
    %215 = vmatpush1.bf16.msra.mxu0 0
    %216 = vmatprep.subr.bf16.mxu0 0
    %217 = vmatpush1.bf16.msra.mxu0 0
    %218 = vmatprep.subr.bf16.mxu0 0
    %219 = vmatpush1.bf16.msra.mxu0 0
    %220 = vmatprep.mubr.bf16.mxu0 0
    %221 = vmatmul.mubr.bf16.gmra.mrb[0].mxu0 %v186
    %v222 = vpop.f32.mrb[0].mxu0
    %v223 = vadd.f32 %v183, %v222
    %v224 = vpop.f32.mrb[0].mxu0
    %v225 = vpop.f32.mrb[0].mxu0
    %v226 = vpop.f32.mrb[0].mxu0
    %227 = vdwg.mxu0
    %v228 = vsub.f32 0.0, %v223
    %v229 = vmul.f32 %v228, 1.442695
    %v230 = vpow.pop %v229
    %v231 = vadd.f32 %v230, 1.0
    %v232 = vrcp.pop %v231
    %v233 = vmul.f32 1.0, %v232
    %234 = vst [vmem:[#allocation2] sm:$0x1] %v233
    // Predicated region
    $region30: #{tpu_custom_call.1} parent=1 // pred_check
      _
    $region31: #{tpu_custom_call.1} parent=1 // pred_check_branch
      %236 = sbr.rel (0) target = $region33
    $region32: #{tpu_custom_call.1} parent=1 // pred_region
      %s238 = ssub.s32 16, 16
      %239 = vsyncadd [#allocation3], %s238
      %s241 = sshll.u32 [#allocation2], 4
      %s242 = int_to_ptr.vmem [resolvable:$true] %s241
      %244 = dma.vmem_to_hbm [thread:$0]  %s242, 16, %s7, [#allocation3]
    $region33: #{tpu_custom_call.1} parent=1 // pred_fallthru
      _
    // Predicated region
    $region34: #{tpu_custom_call.1} parent=1 // pred_check
      _
    $region35: #{tpu_custom_call.1} parent=1 // pred_check_branch
      %246 = sbr.rel (0) target = $region37
    $region36: #{tpu_custom_call.1} parent=1 // pred_region
      %247 = dma.done [#allocation3], 16
    $region37: #{tpu_custom_call.1} parent=1 // pred_fallthru
      _
    %248 = vsyncpa [#allocation3], 1

</llo_original>
